<compile_context>
chip_gen: v7x
topology: tpu7x:2x2x1
jax: 0.10.0
libtpu: 0.0.40
codegen_flags: <defaults>
</compile_context>

<pallas_src>
import jax
import jax.numpy as jnp
from jax import lax
from jax.experimental import pallas as pl
from jax.experimental.pallas import tpu as pltpu


def _round_up(x, k):
    return ((x + k - 1) // k) * k


def _cdiv(a, b):
    return -(-a // b)


def _make_gram_kernel(tile_n, n_rows, tiles_per_split, needs_mask, precision):
    """Kernel factory closing over static tiling config."""

    def kernel(fx_ref, gram_ref):
        t = pl.program_id(1)

        @pl.when(t == 0)
        def _init():
            gram_ref[...] = jnp.zeros_like(gram_ref)

        def accum(x):
            gram_ref[...] += lax.dot_general(
                x, x,
                dimension_numbers=(((0,), (0,)), ((), ())),   # x^T @ x
                preferred_element_type=jnp.float32,
                precision=precision,
            )

        if not needs_mask:
            accum(fx_ref[...])
        else:
            s = pl.program_id(0)
            row0 = (s * tiles_per_split + t) * tile_n      # unclamped global row
            rows_left = n_rows - row0
            is_full = rows_left >= tile_n

            @pl.when(is_full)
            def _full_tile():
                accum(fx_ref[...])

            @pl.when(jnp.logical_not(is_full))
            def _tail_tile():
                # Boundary (or clamped-duplicate) tile: zero rows past n_rows
                # before the dot; out-of-bounds block rows contain garbage.
                x = fx_ref[...]
                rid = lax.broadcasted_iota(jnp.int32, x.shape, 0)
                accum(jnp.where(rid < rows_left, x, jnp.zeros_like(x)))

    return kernel


def basic_orthogonality_loss(fx, *, tile_n=None, precision=lax.Precision.DEFAULT):
    """Compute ||mean_n(fx fx^T) - I||_F^2 with a Pallas TPU kernel.

    Args:
        fx: array [N, m] (f32 or bf16), arbitrary N.
    Returns:
        scalar float32 loss.
    """
    N, m = fx.shape
    itemsize = jnp.dtype(fx.dtype).itemsize
    sublane = max(8, 32 // itemsize)       # 8 for f32, 16 for bf16, 32 for int8/fp8

    # ---- lane packing: widest pack that divides N (free bitcast reshape) -----
    pack = 1
    if m < 128:
        for p in range(max(1, 128 // m), 0, -1):
            if N % p == 0:
                pack = p
                break
    M = pack * m
    n_rows = N // pack

    # ---- generation-aware VMEM budget -----------------------------------------
    M_lanes = _round_up(M, 128)
    row_bytes = M_lanes * itemsize                     # VMEM bytes per packed row
    out_vmem = _round_up(M, 8) * M_lanes * 4           # one f32 (M, M) Gram buffer

    vmem_cap = 64 << 20                                # conservative default (v7x)
    try:
        vmem_cap = int(pltpu.get_tpu_info().vmem_capacity_bytes)
    except Exception:
        pass
    budget = (vmem_cap * 3) // 4                       # headroom for Mosaic scratch
    tile_cap = (16 << 20) if vmem_cap >= (100 << 20) else (10 << 20)

    # Large-m guard: resident Gram + double-buffered input no longer fits VMEM.
    if 2 * out_vmem + 2 * sublane * row_bytes > budget:
        # TODO(synk): tile the (m, m) Gram output over a 2-D grid for very large m.
        fx32 = fx.astype(jnp.float32)
        gram_mean = jnp.dot(fx32.T, fx32, preferred_element_type=jnp.float32)
        gram_mean = gram_mean / jnp.float32(N)
        diff = gram_mean - jnp.eye(m, dtype=jnp.float32)
        return jnp.sum(diff * diff)

    # ---- tile sizing -----------------------------------------------------------
    if tile_n is None:
        avail = budget - 2 * out_vmem
        tile_bytes = max(min(tile_cap, avail // 2), sublane * row_bytes)
        tile_n = (tile_bytes // row_bytes) // sublane * sublane
    tile_n = int(tile_n)
    if tile_n >= n_rows:
        tile_n = n_rows                                # single full-extent block
    else:
        tile_n = max(sublane, (tile_n // sublane) * sublane)

    n_tiles = _cdiv(n_rows, tile_n)
    # 2-way split of the N reduction for v7x's two TensorCores; skip it when the
    # duplicated (masked) boundary tile would be a noticeable fraction of work.
    num_splits = 2 if (n_tiles >= 2 and (n_tiles % 2 == 0 or n_tiles >= 8)) else 1
    tiles_per_split = _cdiv(n_tiles, num_splits)
    needs_mask = (num_splits * tiles_per_split * tile_n) != n_rows

    fx_packed = fx.reshape(n_rows, M)                  # row-major bitcast, no copy

    def fx_index_map(s, t):
        # Clamp grid steps past the last tile (split rounding) onto the final
        # tile; those steps are fully masked to zero inside the kernel.
        return (jnp.minimum(s * tiles_per_split + t, n_tiles - 1), 0)

    vmem_needed = 2 * tile_n * row_bytes + 2 * out_vmem
    vmem_limit = int(min(max(vmem_needed + (8 << 20), 32 << 20),
                         max(48 << 20, (vmem_cap * 4) // 5)))

    cost = pl.CostEstimate(
        flops=2 * n_rows * M * M,
        transcendentals=0,
        bytes_accessed=n_rows * M * itemsize + num_splits * M * M * 4,
    )

    kernel = _make_gram_kernel(tile_n, n_rows, tiles_per_split, needs_mask, precision)

    gram_partial = pl.pallas_call(
        kernel,
        out_shape=jax.ShapeDtypeStruct((num_splits, M, M), jnp.float32),
        grid_spec=pltpu.PrefetchScalarGridSpec(
            num_scalar_prefetch=0,
            grid=(num_splits, tiles_per_split),
            in_specs=[pl.BlockSpec((tile_n, M), fx_index_map)],
            out_specs=pl.BlockSpec((pl.Squeezed(), M, M), lambda s, t: (s, 0, 0)),
        ),
        compiler_params=pltpu.CompilerParams(
            dimension_semantics=("parallel", "arbitrary"),
            vmem_limit_bytes=vmem_limit,
        ),
        cost_estimate=cost,
    )(fx_packed)

    # ---- cheap epilogue in plain JAX (lane-dense kernel output) ----------------
    gram_sum = jnp.sum(gram_partial, axis=0)           # (M, M)
    if pack > 1:
        g = gram_sum.reshape(pack, m, pack, m)
        gram_sum = jnp.diagonal(g, axis1=0, axis2=2).sum(-1)   # (m, m)
    gram_mean = gram_sum / jnp.float32(N)
    diff = gram_mean - jnp.eye(m, dtype=jnp.float32)
    return jnp.sum(diff * diff)


def _reference_loss(fx):
    fx = fx.astype(jnp.float32)
    m = fx.shape[1]
    gram = jnp.mean(fx[:, :, None] * fx[:, None, :], axis=0)
    return jnp.sum((gram - jnp.eye(m, dtype=jnp.float32)) ** 2)


if __name__ == "__main__":
    key = jax.random.PRNGKey(0)
    cases = [
        # (shape, dtype, tile_n)
        ((256, 32), jnp.float32, None),     # pack=4, single aligned tile
        ((1000, 64), jnp.float32, None),    # pack=2, single full-extent tile
        ((600, 10), jnp.bfloat16, None),    # pack=12 (M=120), bf16 path
        ((2048, 32), jnp.float32, 128),     # 4 tiles -> 2-way split, aligned
        ((1500, 32), jnp.float32, 128),     # 3 tiles -> single split, masked tail
        ((4600, 32), jnp.float32, 128),     # 9 tiles -> split + clamped dup + mask
    ]
    keys = jax.random.split(key, len(cases))
    for k, (shape, dtype, tn) in zip(keys, cases):
        fx = jax.random.normal(k, shape, dtype=jnp.float32).astype(dtype)
        loss = basic_orthogonality_loss(fx, tile_n=tn)
        jax.block_until_ready(loss)
        ref = _reference_loss(fx)
        assert jnp.allclose(loss, ref, rtol=2e-3, atol=2e-3), (shape, str(dtype), loss, ref)

    print("KERNEL_OK")
</pallas_src>

<mosaic_0001>
module attributes {stable_mosaic.version = 11 : i64} {
  func.func @kernel(%arg0: i32, %arg1: i32, %arg2: memref<64x128xf32, #tpu.memory_space<vmem>>, %arg3: memref<1x128x128xf32, #tpu.memory_space<vmem>>) attributes {dimension_semantics = [#tpu.dimension_semantics<parallel>, #tpu.dimension_semantics<arbitrary>], iteration_bounds = array<i64: 1, 1>, scalar_prefetch = 0 : i64, scratch_operands = 0 : i64, tpu.core_type = #tpu.core_type<tc>, window_params = [{transform_indices = @transform_0, window_bounds = array<i64: 64, 128>}, {transform_indices = @transform_1, window_bounds = array<i64: 1, 128, 128>}]} {
    %c0_i32 = arith.constant 0 : i32
    %0 = arith.cmpi eq, %arg1, %c0_i32 : i32
    %1 = arith.extui %0 : i1 to i32
    %c0_i32_0 = arith.constant 0 : i32
    %2 = arith.cmpi ne, %1, %c0_i32_0 : i32
    scf.if %2 {
      %cst_8 = arith.constant 0.000000e+00 : f32
      %11 = vector.broadcast %cst_8 : f32 to vector<128x128xf32>
      %c0_9 = arith.constant 0 : index
      %c0_10 = arith.constant 0 : index
      %c0_11 = arith.constant 0 : index
      %12 = vector.load %arg3[%c0_9, %c0_10, %c0_11] : memref<1x128x128xf32, #tpu.memory_space<vmem>>, vector<1x128x128xf32>
      %13 = vector.shape_cast %12 : vector<1x128x128xf32> to vector<128x128xf32>
      %14 = vector.shape_cast %11 : vector<128x128xf32> to vector<1x128x128xf32>
      tpu.vector_store %arg3[%c0_9, %c0_10, %c0_11], %14 {strides = array<i32>} : memref<1x128x128xf32, #tpu.memory_space<vmem>>, vector<1x128x128xf32>,
    } else {
    }
    %c0 = arith.constant 0 : index
    %c0_1 = arith.constant 0 : index
    %3 = vector.load %arg2[%c0, %c0_1] : memref<64x128xf32, #tpu.memory_space<vmem>>, vector<64x128xf32>
    %c0_2 = arith.constant 0 : index
    %c0_3 = arith.constant 0 : index
    %c0_4 = arith.constant 0 : index
    %4 = vector.load %arg3[%c0_2, %c0_3, %c0_4] : memref<1x128x128xf32, #tpu.memory_space<vmem>>, vector<1x128x128xf32>
    %5 = vector.shape_cast %4 : vector<1x128x128xf32> to vector<128x128xf32>
    %cst = arith.constant dense<0.000000e+00> : vector<128x128xf32>
    %6 = tpu.matmul %3, %3, %cst {dimension_numbers = #tpu.dot_dimension_numbers<[0], [0], [1], [1], [0, 1, 1, 1], [], []>} : vector<64x128xf32>, vector<64x128xf32>, vector<128x128xf32> -> vector<128x128xf32>
    %7 = arith.addf %5, %6 : vector<128x128xf32>
    %c0_5 = arith.constant 0 : index
    %c0_6 = arith.constant 0 : index
    %c0_7 = arith.constant 0 : index
    %8 = vector.load %arg3[%c0_5, %c0_6, %c0_7] : memref<1x128x128xf32, #tpu.memory_space<vmem>>, vector<1x128x128xf32>
    %9 = vector.shape_cast %8 : vector<1x128x128xf32> to vector<128x128xf32>
    %10 = vector.shape_cast %7 : vector<128x128xf32> to vector<1x128x128xf32>
    tpu.vector_store %arg3[%c0_5, %c0_6, %c0_7], %10 {strides = array<i32>} : memref<1x128x128xf32, #tpu.memory_space<vmem>>, vector<1x128x128xf32>,
    return
  }
  func.func @transform_0(%arg0: i32, %arg1: i32) -> (i32, i32) {
    %c1_i32 = arith.constant 1 : i32
    %0 = arith.muli %arg0, %c1_i32 : i32
    %1 = arith.addi %0, %arg1 : i32
    %c0_i32 = arith.constant 0 : i32
    %2 = arith.minsi %1, %c0_i32 : i32
    %c0_i32_0 = arith.constant 0 : i32
    %c0_i32_1 = arith.constant 0 : i32
    return %2, %c0_i32_0 : i32, i32
  }
  func.func @transform_1(%arg0: i32, %arg1: i32) -> (i32, i32, i32) {
    %c0_i32 = arith.constant 0 : i32
    %c0_i32_0 = arith.constant 0 : i32
    %c0_i32_1 = arith.constant 0 : i32
    return %arg0, %c0_i32, %c0_i32_0 : i32, i32, i32
  }
}

</mosaic_0001>

<llo_original>
// kernel: tpu_custom_call.1
$region0: #{tpu_custom_call.1}
  #allocation0 [shape = 'u32[]', space=smem, size = 0x4, offset = 0x4, fixed_abs, tag = 'smem constant byte address 0x4 - core index']
  #allocation1 [shape = 'u32[144,128]{1,0:T(1,128)}', space=vmem, size = 0x12000, scoped, tag = 'internal scratch']
  %s0 = inlined_call_operand.hbm [shape: f32[64,128], index: 0, kind: input, shape index: {}]
  %s1 = inlined_call_operand.hbm [shape: f32[1,128,128], index: 1, kind: output, shape index: {}]
  %s2 = sld [smem:[#allocation0]]
  $region22: #{tpu_custom_call.1} parent=0
    _
  %s4 = ssub.s32 1, %s2
  %s5 = scalar_select 0, %s4, %s2
  $region1: #{tpu_custom_call.1} parent=0
    #allocation2 [shape = 'u8[32768]{0}', space=vmem, size = 0x8000, scoped, tag = 'input window, operand 0, single buffered']
    #allocation3 [shape = 's32[1]{0}', space=sflag, size = 0x4, scoped, tag = 'scoped memory for tpu_custom_call.1']
    #allocation4 [shape = 's32[1]{0}', space=sflag, size = 0x4, scoped, tag = 'scoped memory for tpu_custom_call.1']
    #allocation5 [shape = 'u8[65536]{0}', space=vmem, size = 0x10000, scoped, tag = 'output window, operand 0, single buffered']
    %6 = vsyncpa [#allocation3], 0
    %7 = vsyncpa [#allocation4], 0
    // Predicated region
    $region2: #{tpu_custom_call.1} parent=1 // pred_check
      _
    $region3: #{tpu_custom_call.1} parent=1 // pred_check_branch
      %9 = sbr.rel (0) target = $region5
    $region4: #{tpu_custom_call.1} parent=1 // pred_region
      %s10 = sadd.s32 0, 0
      %p11 = scmp.lt.s32.totalorder %s10, 0
      %s12 = scalar_select %p11, %s10, 0
      %s13 = smul.u32 8, %s12
      %s15 = ssub.s32 1024, 1024
      %16 = vsyncadd [#allocation3], %s15
      %s17 = smul.addr %s13, 128
      %s18 = scalar_lea.hbm %s0, %s17
      %s19 = sshll.u32 [#allocation2], 4
      %s20 = int_to_ptr.vmem [resolvable:$true] %s19
      %25 = dma.hbm_to_vmem [thread:$0]  %s18, 1024, %s20, [#allocation3], 128, 128, 8
    $region5: #{tpu_custom_call.1} parent=1 // pred_fallthru
      _
    // Predicated region
    $region6: #{tpu_custom_call.1} parent=1 // pred_check
      _
    $region7: #{tpu_custom_call.1} parent=1 // pred_check_branch
      %27 = sbr.rel (0) target = $region9
    $region8: #{tpu_custom_call.1} parent=1 // pred_region
      %28 = dma.done [#allocation3], 1024
    $region9: #{tpu_custom_call.1} parent=1 // pred_fallthru
      _
    %s29 = sadd.s32 0, 0
    %p30 = scmp.lt.s32.totalorder %s29, 0
    %s31 = scalar_select %p30, %s29, 0
    %s32 = smul.u32 8, %s31
    %p33 = scmp.eq.s32.totalorder 0, 0
    // Predicated region
    $region10: #{tpu_custom_call.1} parent=1 // pred_check
      %p34 = pneg %p33
    $region11: #{tpu_custom_call.1} parent=1 // pred_check_branch
      %36 = sbr.rel (%p34) target = $region13
    $region12: #{tpu_custom_call.1} parent=1 // pred_region
      %37 = vst [vmem:[#allocation5] sm:$0xff] 0.0
      %38 = vst [vmem:[#allocation5 + $0x8] sm:$0xff] 0.0
      %39 = vst [vmem:[#allocation5 + $0x10] sm:$0xff] 0.0
      %40 = vst [vmem:[#allocation5 + $0x18] sm:$0xff] 0.0
      %41 = vst [vmem:[#allocation5 + $0x20] sm:$0xff] 0.0
      %42 = vst [vmem:[#allocation5 + $0x28] sm:$0xff] 0.0
      %43 = vst [vmem:[#allocation5 + $0x30] sm:$0xff] 0.0
      %44 = vst [vmem:[#allocation5 + $0x38] sm:$0xff] 0.0
      %45 = vst [vmem:[#allocation5 + $0x40] sm:$0xff] 0.0
      %46 = vst [vmem:[#allocation5 + $0x48] sm:$0xff] 0.0
      %47 = vst [vmem:[#allocation5 + $0x50] sm:$0xff] 0.0
      %48 = vst [vmem:[#allocation5 + $0x58] sm:$0xff] 0.0
      %49 = vst [vmem:[#allocation5 + $0x60] sm:$0xff] 0.0
      %50 = vst [vmem:[#allocation5 + $0x68] sm:$0xff] 0.0
      %51 = vst [vmem:[#allocation5 + $0x70] sm:$0xff] 0.0
      %52 = vst [vmem:[#allocation5 + $0x78] sm:$0xff] 0.0
    $region13: #{tpu_custom_call.1} parent=1 // pred_fallthru
      _
    %v53 = vld [vmem:[#allocation2] sm:$0xff]
    %v54 = vld [vmem:[#allocation2 + $0x8] sm:$0xff]
    %v55 = vld [vmem:[#allocation2 + $0x10] sm:$0xff]
    %v56 = vld [vmem:[#allocation2 + $0x18] sm:$0xff]
    %v57 = vld [vmem:[#allocation2 + $0x20] sm:$0xff]
    %v58 = vld [vmem:[#allocation2 + $0x28] sm:$0xff]
    %v59 = vld [vmem:[#allocation2 + $0x30] sm:$0xff]
    %v60 = vld [vmem:[#allocation2 + $0x38] sm:$0xff]
    %v61 = vld [vmem:[#allocation5] sm:$0xff]
    %v62 = vld [vmem:[#allocation5 + $0x8] sm:$0xff]
    %v63 = vld [vmem:[#allocation5 + $0x10] sm:$0xff]
    %v64 = vld [vmem:[#allocation5 + $0x18] sm:$0xff]
    %v65 = vld [vmem:[#allocation5 + $0x20] sm:$0xff]
    %v66 = vld [vmem:[#allocation5 + $0x28] sm:$0xff]
    %v67 = vld [vmem:[#allocation5 + $0x30] sm:$0xff]
    %v68 = vld [vmem:[#allocation5 + $0x38] sm:$0xff]
    %v69 = vld [vmem:[#allocation5 + $0x40] sm:$0xff]
    %v70 = vld [vmem:[#allocation5 + $0x48] sm:$0xff]
    %v71 = vld [vmem:[#allocation5 + $0x50] sm:$0xff]
    %v72 = vld [vmem:[#allocation5 + $0x58] sm:$0xff]
    %v73 = vld [vmem:[#allocation5 + $0x60] sm:$0xff]
    %v74 = vld [vmem:[#allocation5 + $0x68] sm:$0xff]
    %v75 = vld [vmem:[#allocation5 + $0x70] sm:$0xff]
    %v76 = vld [vmem:[#allocation5 + $0x78] sm:$0xff]
    %77 = vxpose.xlu0.b32.start [1/16] %v53, 128
    %78 = vxpose.xlu0.b32.cont [2/16] %v54, 128
    %79 = vxpose.xlu0.b32.cont [3/16] %v55, 128
    %80 = vxpose.xlu0.b32.cont [4/16] %v56, 128
    %81 = vxpose.xlu0.b32.cont [5/16] %v57, 128
    %82 = vxpose.xlu0.b32.cont [6/16] %v58, 128
    %83 = vxpose.xlu0.b32.cont [7/16] %v59, 128
    %84 = vxpose.xlu0.b32.cont [8/16] %v60, 128
    %85 = vxpose.xlu0.b32.cont [9/16] 0.0, 128
    %86 = vxpose.xlu0.b32.cont [10/16] 0.0, 128
    %87 = vxpose.xlu0.b32.cont [11/16] 0.0, 128
    %88 = vxpose.xlu0.b32.cont [12/16] 0.0, 128
    %89 = vxpose.xlu0.b32.cont [13/16] 0.0, 128
    %90 = vxpose.xlu0.b32.cont [14/16] 0.0, 128
    %91 = vxpose.xlu0.b32.cont [15/16] 0.0, 128
    %92 = vxpose.xlu0.b32.end [16/16] 0.0, 128
    %v93 = vpop.trf.xlu0
    %v94 = vpop.trf.xlu0
    %v95 = vpop.trf.xlu0
    %v96 = vpop.trf.xlu0
    %v97 = vpop.trf.xlu0
    %v98 = vpop.trf.xlu0
    %v99 = vpop.trf.xlu0
    %v100 = vpop.trf.xlu0
    %v101 = vpop.trf.xlu0
    %v102 = vpop.trf.xlu0
    %v103 = vpop.trf.xlu0
    %v104 = vpop.trf.xlu0
    %v105 = vpop.trf.xlu0
    %v106 = vpop.trf.xlu0
    %v107 = vpop.trf.xlu0
    %v108 = vpop.trf.xlu0
    %vm109 = vcmask 523264
    %v111 = vsel %vm109, %v93, 0
    %v114 = vsel %vm109, %v94, 0
    %v117 = vsel %vm109, %v95, 0
    %v120 = vsel %vm109, %v96, 0
    %v123 = vsel %vm109, %v97, 0
    %v126 = vsel %vm109, %v98, 0
    %v129 = vsel %vm109, %v99, 0
    %v132 = vsel %vm109, %v100, 0
    %v135 = vsel %vm109, %v101, 0
    %v138 = vsel %vm109, %v102, 0
    %v141 = vsel %vm109, %v103, 0
    %v144 = vsel %vm109, %v104, 0
    %v147 = vsel %vm109, %v105, 0
    %v150 = vsel %vm109, %v106, 0
    %v153 = vsel %vm109, %v107, 0
    %v156 = vsel %vm109, %v108, 0
    %158 = vmatprep.subr.mxu0 0.0
    %159 = vmatpush1.msra.mxu0 %v53
    %160 = vmatprep.subr.mxu0 0.0
    %161 = vmatpush1.msra.mxu0 %v54
    %162 = vmatprep.subr.mxu0 0.0
    %163 = vmatpush1.msra.mxu0 %v55
    %164 = vmatprep.subr.mxu0 0.0
    %165 = vmatpush1.msra.mxu0 %v56
    %166 = vmatprep.subr.mxu0 0.0
    %167 = vmatpush1.msra.mxu0 %v57
    %168 = vmatprep.subr.mxu0 0.0
    %169 = vmatpush1.msra.mxu0 %v58
    %170 = vmatprep.subr.mxu0 0.0
    %171 = vmatpush1.msra.mxu0 %v59
    %172 = vmatprep.subr.mxu0 0.0
    %173 = vmatpush1.msra.mxu0 %v60
    %174 = vmatprep.subr.mxu0 0.0
    %175 = vmatpush1.msra.mxu0 0.0
    %176 = vmatprep.subr.mxu0 0.0
    %177 = vmatpush1.msra.mxu0 0.0
    %178 = vmatprep.subr.mxu0 0.0
    %179 = vmatpush1.msra.mxu0 0.0
    %180 = vmatprep.subr.mxu0 0.0
    %181 = vmatpush1.msra.mxu0 0.0
    %182 = vmatprep.subr.mxu0 0.0
    %183 = vmatpush1.msra.mxu0 0.0
    %184 = vmatprep.subr.mxu0 0.0
    %185 = vmatpush1.msra.mxu0 0.0
    %186 = vmatprep.subr.mxu0 0.0
    %187 = vmatpush1.msra.mxu0 0.0
    %188 = vmatprep.subr.mxu0 0.0
    %189 = vmatpush1.msra.mxu0 0.0
    %190 = vmatprep.subr.mxu0 0.0
    %191 = vmatpush1.msra.mxu0 0.0
    %192 = vmatprep.subr.mxu0 0.0
    %193 = vmatpush1.msra.mxu0 0.0
    %194 = vmatprep.subr.mxu0 0.0
    %195 = vmatpush1.msra.mxu0 0.0
    %196 = vmatprep.subr.mxu0 0.0
    %197 = vmatpush1.msra.mxu0 0.0
    %198 = vmatprep.subr.mxu0 0.0
    %199 = vmatpush1.msra.mxu0 0.0
    %200 = vmatprep.subr.mxu0 0.0
    %201 = vmatpush1.msra.mxu0 0.0
    %202 = vmatprep.subr.mxu0 0.0
    %203 = vmatpush1.msra.mxu0 0.0
    %204 = vmatprep.subr.mxu0 0.0
    %205 = vmatpush1.msra.mxu0 0.0
    %206 = vmatprep.subr.mxu0 0.0
    %207 = vmatpush1.msra.mxu0 0.0
    %208 = vmatprep.subr.mxu0 0.0
    %209 = vmatpush1.msra.mxu0 0.0
    %210 = vmatprep.subr.mxu0 0.0
    %211 = vmatpush1.msra.mxu0 0.0
    %212 = vmatprep.subr.mxu0 0.0
    %213 = vmatpush1.msra.mxu0 0.0
    %214 = vmatprep.subr.mxu0 0.0
    %215 = vmatpush1.msra.mxu0 0.0
    %216 = vmatprep.subr.mxu0 0.0
    %217 = vmatpush1.msra.mxu0 0.0
    %218 = vmatprep.subr.mxu0 0.0
    %219 = vmatpush1.msra.mxu0 0.0
    %220 = vmatprep.subr.mxu0 0.0
    %221 = vmatpush1.msra.mxu0 0.0
    %222 = vmatprep.mubr.f32.mxu0 0.0
    %223 = vmatmul.mubr.f32.gmra.mrb[0].mxu0 %v111
    %v224 = vpop.f32.mrb[0].mxu0
    %v225 = vadd.f32 0.0, %v224
    %v226 = vpop.f32.mrb[0].mxu0
    %227 = vmatprep.mubr.f32.mxu0 0.0
    %228 = vmatmul.mubr.f32.gmra.mrb[0].mxu0 %v114
    %v229 = vpop.f32.mrb[0].mxu0
    %v230 = vadd.f32 0.0, %v229
    %v231 = vpop.f32.mrb[0].mxu0
    %232 = vmatprep.mubr.f32.mxu0 0.0
    %233 = vmatmul.mubr.f32.gmra.mrb[0].mxu0 %v117
    %v234 = vpop.f32.mrb[0].mxu0
    %v235 = vadd.f32 0.0, %v234
    %v236 = vpop.f32.mrb[0].mxu0
    %237 = vmatprep.mubr.f32.mxu0 0.0
    %238 = vmatmul.mubr.f32.gmra.mrb[0].mxu0 %v120
    %v239 = vpop.f32.mrb[0].mxu0
    %v240 = vadd.f32 0.0, %v239
    %v241 = vpop.f32.mrb[0].mxu0
    %242 = vmatprep.mubr.f32.mxu0 0.0
    %243 = vmatmul.mubr.f32.gmra.mrb[0].mxu0 %v123
    %v244 = vpop.f32.mrb[0].mxu0
    %v245 = vadd.f32 0.0, %v244
    %v246 = vpop.f32.mrb[0].mxu0
    %247 = vmatprep.mubr.f32.mxu0 0.0
    %248 = vmatmul.mubr.f32.gmra.mrb[0].mxu0 %v126
    %v249 = vpop.f32.mrb[0].mxu0
    %v250 = vadd.f32 0.0, %v249
    %v251 = vpop.f32.mrb[0].mxu0
    %252 = vmatprep.mubr.f32.mxu0 0.0
    %253 = vmatmul.mubr.f32.gmra.mrb[0].mxu0 %v129
    %v254 = vpop.f32.mrb[0].mxu0
    %v255 = vadd.f32 0.0, %v254
    %v256 = vpop.f32.mrb[0].mxu0
    %257 = vmatprep.mubr.f32.mxu0 0.0
    %258 = vmatmul.mubr.f32.gmra.mrb[0].mxu0 %v132
    %v259 = vpop.f32.mrb[0].mxu0
    %v260 = vadd.f32 0.0, %v259
    %v261 = vpop.f32.mrb[0].mxu0
    %262 = vmatprep.mubr.f32.mxu0 0.0
    %263 = vmatmul.mubr.f32.gmra.mrb[0].mxu0 %v135
    %v264 = vpop.f32.mrb[0].mxu0
    %v265 = vadd.f32 0.0, %v264
    %v266 = vpop.f32.mrb[0].mxu0
    %267 = vmatprep.mubr.f32.mxu0 0.0
    %268 = vmatmul.mubr.f32.gmra.mrb[0].mxu0 %v138
    %v269 = vpop.f32.mrb[0].mxu0
    %v270 = vadd.f32 0.0, %v269
    %v271 = vpop.f32.mrb[0].mxu0
    %272 = vmatprep.mubr.f32.mxu0 0.0
    %273 = vmatmul.mubr.f32.gmra.mrb[0].mxu0 %v141
    %v274 = vpop.f32.mrb[0].mxu0
    %v275 = vadd.f32 0.0, %v274
    %v276 = vpop.f32.mrb[0].mxu0
    %277 = vmatprep.mubr.f32.mxu0 0.0
    %278 = vmatmul.mubr.f32.gmra.mrb[0].mxu0 %v144
    %v279 = vpop.f32.mrb[0].mxu0
    %v280 = vadd.f32 0.0, %v279
    %v281 = vpop.f32.mrb[0].mxu0
    %282 = vmatprep.mubr.f32.mxu0 0.0
    %283 = vmatmul.mubr.f32.gmra.mrb[0].mxu0 %v147
    %v284 = vpop.f32.mrb[0].mxu0
    %v285 = vadd.f32 0.0, %v284
    %v286 = vpop.f32.mrb[0].mxu0
    %287 = vmatprep.mubr.f32.mxu0 0.0
    %288 = vmatmul.mubr.f32.gmra.mrb[0].mxu0 %v150
    %v289 = vpop.f32.mrb[0].mxu0
    %v290 = vadd.f32 0.0, %v289
    %v291 = vpop.f32.mrb[0].mxu0
    %292 = vmatprep.mubr.f32.mxu0 0.0
    %293 = vmatmul.mubr.f32.gmra.mrb[0].mxu0 %v153
    %v294 = vpop.f32.mrb[0].mxu0
    %v295 = vadd.f32 0.0, %v294
    %v296 = vpop.f32.mrb[0].mxu0
    %297 = vmatprep.mubr.f32.mxu0 0.0
    %298 = vmatmul.mubr.f32.gmra.mrb[0].mxu0 %v156
    %v299 = vpop.f32.mrb[0].mxu0
    %v300 = vadd.f32 0.0, %v299
    %v301 = vpop.f32.mrb[0].mxu0
    %302 = vdwg.mxu0
    %v303 = vadd.f32 %v61, %v225
    %v304 = vadd.f32 %v62, %v230
    %v305 = vadd.f32 %v63, %v235
    %v306 = vadd.f32 %v64, %v240
    %v307 = vadd.f32 %v65, %v245
    %v308 = vadd.f32 %v66, %v250
    %v309 = vadd.f32 %v67, %v255
    %v310 = vadd.f32 %v68, %v260
    %v311 = vadd.f32 %v69, %v265
    %v312 = vadd.f32 %v70, %v270
    %v313 = vadd.f32 %v71, %v275
    %v314 = vadd.f32 %v72, %v280
    %v315 = vadd.f32 %v73, %v285
    %v316 = vadd.f32 %v74, %v290
    %v317 = vadd.f32 %v75, %v295
    %v318 = vadd.f32 %v76, %v300
    %319 = vst [vmem:[#allocation5] sm:$0xff] %v303
    %320 = vst [vmem:[#allocation5 + $0x8] sm:$0xff] %v304
    %321 = vst [vmem:[#allocation5 + $0x10] sm:$0xff] %v305
    %322 = vst [vmem:[#allocation5 + $0x18] sm:$0xff] %v306
    %323 = vst [vmem:[#allocation5 + $0x20] sm:$0xff] %v307
    %324 = vst [vmem:[#allocation5 + $0x28] sm:$0xff] %v308
    %325 = vst [vmem:[#allocation5 + $0x30] sm:$0xff] %v309
    %326 = vst [vmem:[#allocation5 + $0x38] sm:$0xff] %v310
    %327 = vst [vmem:[#allocation5 + $0x40] sm:$0xff] %v311
    %328 = vst [vmem:[#allocation5 + $0x48] sm:$0xff] %v312
    %329 = vst [vmem:[#allocation5 + $0x50] sm:$0xff] %v313
    %330 = vst [vmem:[#allocation5 + $0x58] sm:$0xff] %v314
    %331 = vst [vmem:[#allocation5 + $0x60] sm:$0xff] %v315
    %332 = vst [vmem:[#allocation5 + $0x68] sm:$0xff] %v316
    %333 = vst [vmem:[#allocation5 + $0x70] sm:$0xff] %v317
    %334 = vst [vmem:[#allocation5 + $0x78] sm:$0xff] %v318
    // Predicated region
    $region14: #{tpu_custom_call.1} parent=1 // pred_check
      _
    $region15: #{tpu_custom_call.1} parent=1 // pred_check_branch
      %336 = sbr.rel (0) target = $region17
    $region16: #{tpu_custom_call.1} parent=1 // pred_region
      %s338 = ssub.s32 2048, 2048
      %339 = vsyncadd [#allocation4], %s338
      %s340 = sshll.u32 [#allocation5], 4
      %s341 = int_to_ptr.vmem [resolvable:$true] %s340
      %346 = dma.vmem_to_hbm [thread:$0]  %s341, 2048, %s1, [#allocation4], 128, 128, 8
    $region17: #{tpu_custom_call.1} parent=1 // pred_fallthru
      _
    // Predicated region
    $region18: #{tpu_custom_call.1} parent=1 // pred_check
      _
    $region19: #{tpu_custom_call.1} parent=1 // pred_check_branch
      %348 = sbr.rel (0) target = $region21
    $region20: #{tpu_custom_call.1} parent=1 // pred_region
      %349 = dma.done [#allocation4], 2048
    $region21: #{tpu_custom_call.1} parent=1 // pred_fallthru
      _
    %350 = vsyncpa [#allocation3], 1
    %351 = vsyncpa [#allocation4], 1

</llo_original>
